<compile_context>
chip_gen: v6e
topology: v6e:2x2x1
jax: 0.10.0
libtpu: 0.0.40
codegen_flags: <defaults>
</compile_context>

<pallas_src>
import jax
import jax.numpy as jnp
from jax.experimental import pallas as pl
from jax.experimental.pallas import tpu as pltpu

_LANE = 128      # lane tile (last dim)
_SUBLANE = 8     # f32 sublane tile (second-to-last dim)


def _round_up(v, m):
    return ((v + m - 1) // m) * m


def _pad2d(x, rows, cols):
    r, c = x.shape
    return jnp.pad(x, ((0, rows - r), (0, cols - c)))


# ---------------------------------------------------------------------------
# Fused Pallas kernel:  out = relu(A @ relu(A @ (X W1) + b1) W2 + b2)
# ---------------------------------------------------------------------------
def _make_fused_gcn_kernel(agg_first_1, agg_first_2):
    """agg_first_l=True -> layer l computes (A @ X) @ W (aggregate on the narrower
    input width); False -> A @ (X @ W).  Chosen statically from the true dims."""

    def kernel(a_ref, x_ref, w1_ref, b1_ref, w2_ref, b2_ref, o_ref, h_ref):
        a = a_ref[...]
        x = x_ref[...]

        # ---- layer 1: h = relu(A_hat aggregate(X, W1) + b1) ----
        if agg_first_1:
            pre1 = jnp.dot(
                jnp.dot(a, x, preferred_element_type=jnp.float32),
                w1_ref[...], preferred_element_type=jnp.float32)
        else:
            pre1 = jnp.dot(
                a,
                jnp.dot(x, w1_ref[...], preferred_element_type=jnp.float32),
                preferred_element_type=jnp.float32)
        h_ref[...] = jnp.maximum(pre1 + b1_ref[...], 0.0)

        # ---- layer 2: out = relu(A_hat aggregate(h, W2) + b2) ----
        h = h_ref[...]
        if agg_first_2:
            pre2 = jnp.dot(
                jnp.dot(a, h, preferred_element_type=jnp.float32),
                w2_ref[...], preferred_element_type=jnp.float32)
        else:
            pre2 = jnp.dot(
                a,
                jnp.dot(h, w2_ref[...], preferred_element_type=jnp.float32),
                preferred_element_type=jnp.float32)
        o_ref[...] = jnp.maximum(pre2 + b2_ref[...], 0.0).astype(o_ref.dtype)

    return kernel


# ---------------------------------------------------------------------------
# Wrapper: pad to TPU-friendly shapes, call the fused kernel, slice back.
# ---------------------------------------------------------------------------
def gnn_forward(a_hat, x, params):
    n, f_in = x.shape
    hidden = params["w1"].shape[1]
    f_out = params["w2"].shape[1]

    n_p = _round_up(n, _SUBLANE)
    f_in_p = _round_up(f_in, _LANE)
    hid_p = _round_up(hidden, _LANE)
    f_out_p = _round_up(f_out, _LANE)

    a_p = _pad2d(a_hat.astype(jnp.float32), n_p, n_p)
    x_p = _pad2d(x.astype(jnp.float32), n_p, f_in_p)
    w1_p = _pad2d(params["w1"].astype(jnp.float32), f_in_p, hid_p)
    w2_p = _pad2d(params["w2"].astype(jnp.float32), hid_p, f_out_p)
    b1_p = jnp.pad(params["b1"].astype(jnp.float32),
                   (0, hid_p - hidden)).reshape(1, hid_p)
    b2_p = jnp.pad(params["b2"].astype(jnp.float32),
                   (0, f_out_p - f_out)).reshape(1, f_out_p)

    kernel = _make_fused_gcn_kernel(agg_first_1=(f_in <= hidden),
                                    agg_first_2=(hidden <= f_out))

    # Advisory cost estimate (4 MXU matmuls + f32 traffic on padded shapes).
    flops = (2 * n_p * f_in_p * hid_p + 2 * n_p * n_p * hid_p
             + 2 * n_p * hid_p * f_out_p + 2 * n_p * n_p * f_out_p)
    bytes_accessed = 4 * (a_p.size + x_p.size + w1_p.size + w2_p.size
                          + b1_p.size + b2_p.size + n_p * f_out_p)

    out_p = pl.pallas_call(
        kernel,
        out_shape=jax.ShapeDtypeStruct((n_p, f_out_p), jnp.float32),
        grid=(1,),
        in_specs=[
            pl.BlockSpec((n_p, n_p), lambda i: (0, 0)),       # A_hat
            pl.BlockSpec((n_p, f_in_p), lambda i: (0, 0)),    # X
            pl.BlockSpec((f_in_p, hid_p), lambda i: (0, 0)),  # W1
            pl.BlockSpec((1, hid_p), lambda i: (0, 0)),       # b1
            pl.BlockSpec((hid_p, f_out_p), lambda i: (0, 0)), # W2
            pl.BlockSpec((1, f_out_p), lambda i: (0, 0)),     # b2
        ],
        out_specs=pl.BlockSpec((n_p, f_out_p), lambda i: (0, 0)),
        scratch_shapes=[pltpu.VMEM((n_p, hid_p), jnp.float32)],  # intermediate h
        compiler_params=pltpu.CompilerParams(
            dimension_semantics=("arbitrary",)),
        cost_estimate=pl.CostEstimate(
            flops=flops, transcendentals=0, bytes_accessed=bytes_accessed),
    )(a_p, x_p, w1_p, b1_p, w2_p, b2_p)

    return out_p[:n, :f_out]


# ---------------------------------------------------------------------------
# Glue: build A_hat = D^-1/2 (A + I_remaining) D^-1/2 (PyG GCNConv gcn_norm).
# Computed ONCE per graph (edge_index is static) and cached outside the jit.
# ---------------------------------------------------------------------------
def normalized_adjacency(edge_index, num_nodes):
    src = edge_index[0]
    dst = edge_index[1]
    # A[target, source] += 1 (duplicate edges accumulate, like PyG scatter-add).
    adj = jnp.zeros((num_nodes, num_nodes), jnp.float32)
    adj = adj.at[dst, src].add(1.0)
    # add_remaining_self_loops: only add a self-loop where none exists.
    diag = jnp.diagonal(adj)
    adj = adj + jnp.diag(jnp.where(diag == 0.0, 1.0, 0.0))
    deg = jnp.sum(adj, axis=1)
    d_inv_sqrt = jnp.where(deg > 0, jax.lax.rsqrt(deg), 0.0)
    return d_inv_sqrt[:, None] * adj * d_inv_sqrt[None, :]


def init_params(key, input_dim, hidden_dim, output_dim):
    k1, k2 = jax.random.split(key)
    w1 = jax.random.normal(k1, (input_dim, hidden_dim), jnp.float32) * (
        1.0 / jnp.sqrt(jnp.float32(input_dim)))
    w2 = jax.random.normal(k2, (hidden_dim, output_dim), jnp.float32) * (
        1.0 / jnp.sqrt(jnp.float32(hidden_dim)))
    b1 = jnp.zeros((hidden_dim,), jnp.float32)
    b2 = jnp.zeros((output_dim,), jnp.float32)
    return {"w1": w1, "b1": b1, "w2": w2, "b2": b2}


if __name__ == "__main__":
    key = jax.random.PRNGKey(0)
    k_x, k_p = jax.random.split(key)

    num_nodes = 8
    input_dim, hidden_dim, output_dim = 16, 32, 8

    # Node features.
    x = jax.random.normal(k_x, (num_nodes, input_dim), jnp.float32)

    # Small undirected ring graph as edge_index [2, E] (both directions).
    src = jnp.arange(num_nodes, dtype=jnp.int32)
    dst = (src + 1) % num_nodes
    edge_index = jnp.concatenate(
        [jnp.stack([src, dst]), jnp.stack([dst, src])], axis=1)

    params = init_params(k_p, input_dim, hidden_dim, output_dim)

    # A_hat built once (hoisted out of the per-call forward).
    a_hat = jax.block_until_ready(normalized_adjacency(edge_index, num_nodes))

    forward = jax.jit(gnn_forward)
    out = forward(a_hat, x, params)
    jax.block_until_ready(out)
    assert out.shape == (num_nodes, output_dim)
    print("KERNEL_OK")
</pallas_src>

<mosaic_0001>
module attributes {stable_mosaic.version = 11 : i64} {
  func.func @kernel(%arg0: i32, %arg1: memref<8x8xf32, #tpu.memory_space<vmem>>, %arg2: memref<8x128xf32, #tpu.memory_space<vmem>>, %arg3: memref<128x128xf32, #tpu.memory_space<vmem>>, %arg4: memref<1x128xf32, #tpu.memory_space<vmem>>, %arg5: memref<128x128xf32, #tpu.memory_space<vmem>>, %arg6: memref<1x128xf32, #tpu.memory_space<vmem>>, %arg7: memref<8x128xf32, #tpu.memory_space<vmem>>, %arg8: memref<8x128xf32, #tpu.memory_space<vmem>>) attributes {dimension_semantics = [#tpu.dimension_semantics<arbitrary>], iteration_bounds = array<i64: 1>, scalar_prefetch = 0 : i64, scratch_operands = 1 : i64, tpu.core_type = #tpu.core_type<tc>, window_params = [{pipeline_mode = #tpu.pipeline_mode<synchronous>, transform_indices = @transform_0, window_bounds = array<i64: 8, 8>}, {pipeline_mode = #tpu.pipeline_mode<synchronous>, transform_indices = @transform_1, window_bounds = array<i64: 8, 128>}, {pipeline_mode = #tpu.pipeline_mode<synchronous>, transform_indices = @transform_2, window_bounds = array<i64: 128, 128>}, {pipeline_mode = #tpu.pipeline_mode<synchronous>, transform_indices = @transform_3, window_bounds = array<i64: 1, 128>}, {pipeline_mode = #tpu.pipeline_mode<synchronous>, transform_indices = @transform_4, window_bounds = array<i64: 128, 128>}, {pipeline_mode = #tpu.pipeline_mode<synchronous>, transform_indices = @transform_5, window_bounds = array<i64: 1, 128>}, {pipeline_mode = #tpu.pipeline_mode<synchronous>, transform_indices = @transform_6, window_bounds = array<i64: 8, 128>}]} {
    %c0 = arith.constant 0 : index
    %c0_0 = arith.constant 0 : index
    %0 = vector.load %arg1[%c0, %c0_0] : memref<8x8xf32, #tpu.memory_space<vmem>>, vector<8x8xf32>
    %c0_1 = arith.constant 0 : index
    %c0_2 = arith.constant 0 : index
    %1 = vector.load %arg2[%c0_1, %c0_2] : memref<8x128xf32, #tpu.memory_space<vmem>>, vector<8x128xf32>
    %cst = arith.constant dense<0.000000e+00> : vector<8x128xf32>
    %2 = tpu.matmul %0, %1, %cst {dimension_numbers = #tpu.dot_dimension_numbers<[1], [0], [0], [1], [0, 0, 1, 1], [], []>} : vector<8x8xf32>, vector<8x128xf32>, vector<8x128xf32> -> vector<8x128xf32>
    %c0_3 = arith.constant 0 : index
    %c0_4 = arith.constant 0 : index
    %3 = vector.load %arg3[%c0_3, %c0_4] : memref<128x128xf32, #tpu.memory_space<vmem>>, vector<128x128xf32>
    %cst_5 = arith.constant dense<0.000000e+00> : vector<8x128xf32>
    %4 = tpu.matmul %2, %3, %cst_5 {dimension_numbers = #tpu.dot_dimension_numbers<[1], [0], [0], [1], [0, 0, 1, 1], [], []>} : vector<8x128xf32>, vector<128x128xf32>, vector<8x128xf32> -> vector<8x128xf32>
    %c0_6 = arith.constant 0 : index
    %c0_7 = arith.constant 0 : index
    %5 = vector.load %arg4[%c0_6, %c0_7] : memref<1x128xf32, #tpu.memory_space<vmem>>, vector<1x128xf32>
    %6 = vector.broadcast %5 : vector<1x128xf32> to vector<8x128xf32>
    %7 = arith.addf %4, %6 : vector<8x128xf32>
    %cst_8 = arith.constant 0.000000e+00 : f32
    %8 = vector.broadcast %cst_8 : f32 to vector<8x128xf32>
    %9 = arith.maximumf %7, %8 : vector<8x128xf32>
    %c0_9 = arith.constant 0 : index
    %c0_10 = arith.constant 0 : index
    %10 = vector.load %arg8[%c0_9, %c0_10] : memref<8x128xf32, #tpu.memory_space<vmem>>, vector<8x128xf32>
    tpu.vector_store %arg8[%c0_9, %c0_10], %9 {strides = array<i32>} : memref<8x128xf32, #tpu.memory_space<vmem>>, vector<8x128xf32>,
    %c0_11 = arith.constant 0 : index
    %c0_12 = arith.constant 0 : index
    %11 = vector.load %arg8[%c0_11, %c0_12] : memref<8x128xf32, #tpu.memory_space<vmem>>, vector<8x128xf32>
    %c0_13 = arith.constant 0 : index
    %c0_14 = arith.constant 0 : index
    %12 = vector.load %arg5[%c0_13, %c0_14] : memref<128x128xf32, #tpu.memory_space<vmem>>, vector<128x128xf32>
    %cst_15 = arith.constant dense<0.000000e+00> : vector<8x128xf32>
    %13 = tpu.matmul %11, %12, %cst_15 {dimension_numbers = #tpu.dot_dimension_numbers<[1], [0], [0], [1], [0, 0, 1, 1], [], []>} : vector<8x128xf32>, vector<128x128xf32>, vector<8x128xf32> -> vector<8x128xf32>
    %cst_16 = arith.constant dense<0.000000e+00> : vector<8x128xf32>
    %14 = tpu.matmul %0, %13, %cst_16 {dimension_numbers = #tpu.dot_dimension_numbers<[1], [0], [0], [1], [0, 0, 1, 1], [], []>} : vector<8x8xf32>, vector<8x128xf32>, vector<8x128xf32> -> vector<8x128xf32>
    %c0_17 = arith.constant 0 : index
    %c0_18 = arith.constant 0 : index
    %15 = vector.load %arg6[%c0_17, %c0_18] : memref<1x128xf32, #tpu.memory_space<vmem>>, vector<1x128xf32>
    %16 = vector.broadcast %15 : vector<1x128xf32> to vector<8x128xf32>
    %17 = arith.addf %14, %16 : vector<8x128xf32>
    %cst_19 = arith.constant 0.000000e+00 : f32
    %18 = vector.broadcast %cst_19 : f32 to vector<8x128xf32>
    %19 = arith.maximumf %17, %18 : vector<8x128xf32>
    %c0_20 = arith.constant 0 : index
    %c0_21 = arith.constant 0 : index
    %20 = vector.load %arg7[%c0_20, %c0_21] : memref<8x128xf32, #tpu.memory_space<vmem>>, vector<8x128xf32>
    tpu.vector_store %arg7[%c0_20, %c0_21], %19 {strides = array<i32>} : memref<8x128xf32, #tpu.memory_space<vmem>>, vector<8x128xf32>,
    return
  }
  func.func @transform_0(%arg0: i32) -> (i32, i32) {
    %c0_i32 = arith.constant 0 : i32
    %c0_i32_0 = arith.constant 0 : i32
    %c0_i32_1 = arith.constant 0 : i32
    return %c0_i32, %c0_i32_0 : i32, i32
  }
  func.func @transform_1(%arg0: i32) -> (i32, i32) {
    %c0_i32 = arith.constant 0 : i32
    %c0_i32_0 = arith.constant 0 : i32
    %c0_i32_1 = arith.constant 0 : i32
    return %c0_i32, %c0_i32_0 : i32, i32
  }
  func.func @transform_2(%arg0: i32) -> (i32, i32) {
    %c0_i32 = arith.constant 0 : i32
    %c0_i32_0 = arith.constant 0 : i32
    %c0_i32_1 = arith.constant 0 : i32
    return %c0_i32, %c0_i32_0 : i32, i32
  }
  func.func @transform_3(%arg0: i32) -> (i32, i32) {
    %c0_i32 = arith.constant 0 : i32
    %c0_i32_0 = arith.constant 0 : i32
    %c0_i32_1 = arith.constant 0 : i32
    return %c0_i32, %c0_i32_0 : i32, i32
  }
  func.func @transform_4(%arg0: i32) -> (i32, i32) {
    %c0_i32 = arith.constant 0 : i32
    %c0_i32_0 = arith.constant 0 : i32
    %c0_i32_1 = arith.constant 0 : i32
    return %c0_i32, %c0_i32_0 : i32, i32
  }
  func.func @transform_5(%arg0: i32) -> (i32, i32) {
    %c0_i32 = arith.constant 0 : i32
    %c0_i32_0 = arith.constant 0 : i32
    %c0_i32_1 = arith.constant 0 : i32
    return %c0_i32, %c0_i32_0 : i32, i32
  }
  func.func @transform_6(%arg0: i32) -> (i32, i32) {
    %c0_i32 = arith.constant 0 : i32
    %c0_i32_0 = arith.constant 0 : i32
    %c0_i32_1 = arith.constant 0 : i32
    return %c0_i32, %c0_i32_0 : i32, i32
  }
}

</mosaic_0001>

<llo_original>
// kernel: gnn_forward.1
$region0: #{gnn_forward.1}
  #allocation0 [shape = 'u32[]', space=smem, size = 0x4, offset = 0x4, fixed_abs, tag = 'smem constant byte address 0x4 - core index']
  #allocation1 [shape = 'u32[144,128]{1,0:T(1,128)}', space=vmem, size = 0x12000, scoped, tag = 'internal scratch']
  #allocation2 [shape = 'f32[8,128]{1,0:T(8,128)}', space=vmem, size = 0x1000, scoped, tag = 'scratch operand']
  %s0 = inlined_call_operand.vmem [shape: f32[8,8], index: 0, kind: input, shape index: {}]
  %s1 = inlined_call_operand.vmem [shape: f32[8,128], index: 1, kind: input, shape index: {}]
  %s2 = inlined_call_operand.vmem [shape: f32[128,128], index: 2, kind: input, shape index: {}]
  %s3 = inlined_call_operand.vmem [shape: f32[1,128], index: 3, kind: input, shape index: {}]
  %s4 = inlined_call_operand.vmem [shape: f32[128,128], index: 4, kind: input, shape index: {}]
  %s5 = inlined_call_operand.vmem [shape: f32[1,128], index: 5, kind: input, shape index: {}]
  %s6 = inlined_call_operand.hbm [shape: f32[8,128], index: 6, kind: output, shape index: {}]
  %s7 = sld [smem:[#allocation0]]
  $region34: #{gnn_forward.1} parent=0
    _
  %s9 = ssub.s32 1, %s7
  %s10 = scalar_select 0, %s9, %s7
  $region1: #{gnn_forward.1} parent=0
    #allocation3 [shape = 'u8[4096]{0}', space=vmem, size = 0x1000, scoped, tag = 'output window, operand 0, single buffered']
    #allocation4 [shape = 's32[1]{0}', space=sflag, size = 0x4, scoped, tag = 'scoped memory for gnn_forward.1']
    %11 = vsyncpa [#allocation4], 0
    // Predicated region
    $region2: #{gnn_forward.1} parent=1 // pred_check
      _
    $region3: #{gnn_forward.1} parent=1 // pred_check_branch
      %13 = sbr.rel (0) target = $region5
    $region4: #{gnn_forward.1} parent=1 // pred_region
      _
    $region5: #{gnn_forward.1} parent=1 // pred_fallthru
      _
    // Predicated region
    $region6: #{gnn_forward.1} parent=1 // pred_check
      _
    $region7: #{gnn_forward.1} parent=1 // pred_check_branch
      %15 = sbr.rel (0) target = $region9
    $region8: #{gnn_forward.1} parent=1 // pred_region
      _
    $region9: #{gnn_forward.1} parent=1 // pred_fallthru
      _
    // Predicated region
    $region10: #{gnn_forward.1} parent=1 // pred_check
      _
    $region11: #{gnn_forward.1} parent=1 // pred_check_branch
      %17 = sbr.rel (0) target = $region13
    $region12: #{gnn_forward.1} parent=1 // pred_region
      _
    $region13: #{gnn_forward.1} parent=1 // pred_fallthru
      _
    // Predicated region
    $region14: #{gnn_forward.1} parent=1 // pred_check
      _
    $region15: #{gnn_forward.1} parent=1 // pred_check_branch
      %19 = sbr.rel (0) target = $region17
    $region16: #{gnn_forward.1} parent=1 // pred_region
      _
    $region17: #{gnn_forward.1} parent=1 // pred_fallthru
      _
    // Predicated region
    $region18: #{gnn_forward.1} parent=1 // pred_check
      _
    $region19: #{gnn_forward.1} parent=1 // pred_check_branch
      %21 = sbr.rel (0) target = $region21
    $region20: #{gnn_forward.1} parent=1 // pred_region
      _
    $region21: #{gnn_forward.1} parent=1 // pred_fallthru
      _
    // Predicated region
    $region22: #{gnn_forward.1} parent=1 // pred_check
      _
    $region23: #{gnn_forward.1} parent=1 // pred_check_branch
      %23 = sbr.rel (0) target = $region25
    $region24: #{gnn_forward.1} parent=1 // pred_region
      _
    $region25: #{gnn_forward.1} parent=1 // pred_fallthru
      _
    %v24 = vld [vmem:[%s0] sm:$0xff]
    %v25 = vld [vmem:[%s1] sm:$0xff]
    %vm26 = vcmask 64512
    %v28 = vsel %vm26, %v24, 0
    %30 = vmatprep.subr.mxu0 0.0
    %31 = vmatpush1.msra.mxu0 0.0
    %32 = vmatprep.subr.mxu0 0.0
    %33 = vmatpush1.msra.mxu0 0.0
    %34 = vmatprep.subr.mxu0 0.0
    %35 = vmatpush1.msra.mxu0 0.0
    %36 = vmatprep.subr.mxu0 0.0
    %37 = vmatpush1.msra.mxu0 0.0
    %38 = vmatprep.subr.mxu0 0.0
    %39 = vmatpush1.msra.mxu0 0.0
    %40 = vmatprep.subr.mxu0 0.0
    %41 = vmatpush1.msra.mxu0 0.0
    %42 = vmatprep.subr.mxu0 0.0
    %43 = vmatpush1.msra.mxu0 0.0
    %44 = vmatprep.subr.mxu0 0.0
    %45 = vmatpush1.msra.mxu0 0.0
    %46 = vmatprep.subr.mxu0 0.0
    %47 = vmatpush1.msra.mxu0 0.0
    %48 = vmatprep.subr.mxu0 0.0
    %49 = vmatpush1.msra.mxu0 0.0
    %50 = vmatprep.subr.mxu0 0.0
    %51 = vmatpush1.msra.mxu0 0.0
    %52 = vmatprep.subr.mxu0 0.0
    %53 = vmatpush1.msra.mxu0 0.0
    %54 = vmatprep.subr.mxu0 0.0
    %55 = vmatpush1.msra.mxu0 0.0
    %56 = vmatprep.subr.mxu0 0.0
    %57 = vmatpush1.msra.mxu0 0.0
    %58 = vmatprep.subr.mxu0 0.0
    %59 = vmatpush1.msra.mxu0 0.0
    %60 = vmatprep.subr.mxu0 0.0
    %61 = vmatpush1.msra.mxu0 %v25
    %62 = vmatprep.subr.mxu0 0.0
    %63 = vmatpush2.msra.mxu0 0.0
    %64 = vmatprep.subr.mxu0 0.0
    %65 = vmatpush2.msra.mxu0 0.0
    %66 = vmatprep.subr.mxu0 0.0
    %67 = vmatpush2.msra.mxu0 0.0
    %68 = vmatprep.subr.mxu0 0.0
    %69 = vmatpush2.msra.mxu0 0.0
    %70 = vmatprep.subr.mxu0 0.0
    %71 = vmatpush2.msra.mxu0 0.0
    %72 = vmatprep.subr.mxu0 0.0
    %73 = vmatpush2.msra.mxu0 0.0
    %74 = vmatprep.subr.mxu0 0.0
    %75 = vmatpush2.msra.mxu0 0.0
    %76 = vmatprep.subr.mxu0 0.0
    %77 = vmatpush2.msra.mxu0 0.0
    %78 = vmatprep.subr.mxu0 0.0
    %79 = vmatpush2.msra.mxu0 0.0
    %80 = vmatprep.subr.mxu0 0.0
    %81 = vmatpush2.msra.mxu0 0.0
    %82 = vmatprep.subr.mxu0 0.0
    %83 = vmatpush2.msra.mxu0 0.0
    %84 = vmatprep.subr.mxu0 0.0
    %85 = vmatpush2.msra.mxu0 0.0
    %86 = vmatprep.subr.mxu0 0.0
    %87 = vmatpush2.msra.mxu0 0.0
    %88 = vmatprep.subr.mxu0 0.0
    %89 = vmatpush2.msra.mxu0 0.0
    %90 = vmatprep.subr.mxu0 0.0
    %91 = vmatpush2.msra.mxu0 0.0
    %92 = vmatprep.subr.mxu0 0.0
    %93 = vmatpush2.msra.mxu0 0.0
    %94 = vmatprep.mubr.f32.mxu0 0.0
    %95 = vmatmul.mubr.f32.gmra.mxu0 %v28
    %v96 = vpop.f32.mrf.mxu0
    %v97 = vadd.f32 0.0, %v96
    %v98 = vpop.f32.mrf.mxu0
    %99 = vdwg.mxu0
    %v100 = vld [vmem:[%s2] sm:$0xff]
    %v101 = vld [vmem:[%s2 + $0x8] sm:$0xff]
    %v102 = vld [vmem:[%s2 + $0x10] sm:$0xff]
    %v103 = vld [vmem:[%s2 + $0x18] sm:$0xff]
    %v104 = vld [vmem:[%s2 + $0x20] sm:$0xff]
    %v105 = vld [vmem:[%s2 + $0x28] sm:$0xff]
    %v106 = vld [vmem:[%s2 + $0x30] sm:$0xff]
    %v107 = vld [vmem:[%s2 + $0x38] sm:$0xff]
    %v108 = vld [vmem:[%s2 + $0x40] sm:$0xff]
    %v109 = vld [vmem:[%s2 + $0x48] sm:$0xff]
    %v110 = vld [vmem:[%s2 + $0x50] sm:$0xff]
    %v111 = vld [vmem:[%s2 + $0x58] sm:$0xff]
    %v112 = vld [vmem:[%s2 + $0x60] sm:$0xff]
    %v113 = vld [vmem:[%s2 + $0x68] sm:$0xff]
    %v114 = vld [vmem:[%s2 + $0x70] sm:$0xff]
    %v115 = vld [vmem:[%s2 + $0x78] sm:$0xff]
    %v116 = vld [vmem:[%s3] sm:$0x1]
    %v118 = vlaneseq
    %v119 = vshrl.u32 %v118, 7
    %v120 = vsub.s32 0, %v119
    %v121 = vrot.slane %v116, %v120
    %123 = vmatprep.subr.mxu0 0.0
    %124 = vmatpush1.msra.mxu0 %v115
    %125 = vmatprep.subr.mxu0 0.0
    %126 = vmatpush1.msra.mxu0 %v114
    %127 = vmatprep.subr.mxu0 0.0
    %128 = vmatpush1.msra.mxu0 %v113
    %129 = vmatprep.subr.mxu0 0.0
    %130 = vmatpush1.msra.mxu0 %v112
    %131 = vmatprep.subr.mxu0 0.0
    %132 = vmatpush1.msra.mxu0 %v111
    %133 = vmatprep.subr.mxu0 0.0
    %134 = vmatpush1.msra.mxu0 %v110
    %135 = vmatprep.subr.mxu0 0.0
    %136 = vmatpush1.msra.mxu0 %v109
    %137 = vmatprep.subr.mxu0 0.0
    %138 = vmatpush1.msra.mxu0 %v108
    %139 = vmatprep.subr.mxu0 0.0
    %140 = vmatpush1.msra.mxu0 %v107
    %141 = vmatprep.subr.mxu0 0.0
    %142 = vmatpush1.msra.mxu0 %v106
    %143 = vmatprep.subr.mxu0 0.0
    %144 = vmatpush1.msra.mxu0 %v105
    %145 = vmatprep.subr.mxu0 0.0
    %146 = vmatpush1.msra.mxu0 %v104
    %147 = vmatprep.subr.mxu0 0.0
    %148 = vmatpush1.msra.mxu0 %v103
    %149 = vmatprep.subr.mxu0 0.0
    %150 = vmatpush1.msra.mxu0 %v102
    %151 = vmatprep.subr.mxu0 0.0
    %152 = vmatpush1.msra.mxu0 %v101
    %153 = vmatprep.subr.mxu0 0.0
    %154 = vmatpush1.msra.mxu0 %v100
    %155 = vmatprep.subr.mxu0 0.0
    %156 = vmatpush2.msra.mxu0 0.0
    %157 = vmatprep.subr.mxu0 0.0
    %158 = vmatpush2.msra.mxu0 0.0
    %159 = vmatprep.subr.mxu0 0.0
    %160 = vmatpush2.msra.mxu0 0.0
    %161 = vmatprep.subr.mxu0 0.0
    %162 = vmatpush2.msra.mxu0 0.0
    %163 = vmatprep.subr.mxu0 0.0
    %164 = vmatpush2.msra.mxu0 0.0
    %165 = vmatprep.subr.mxu0 0.0
    %166 = vmatpush2.msra.mxu0 0.0
    %167 = vmatprep.subr.mxu0 0.0
    %168 = vmatpush2.msra.mxu0 0.0
    %169 = vmatprep.subr.mxu0 0.0
    %170 = vmatpush2.msra.mxu0 0.0
    %171 = vmatprep.subr.mxu0 0.0
    %172 = vmatpush2.msra.mxu0 0.0
    %173 = vmatprep.subr.mxu0 0.0
    %174 = vmatpush2.msra.mxu0 0.0
    %175 = vmatprep.subr.mxu0 0.0
    %176 = vmatpush2.msra.mxu0 0.0
    %177 = vmatprep.subr.mxu0 0.0
    %178 = vmatpush2.msra.mxu0 0.0
    %179 = vmatprep.subr.mxu0 0.0
    %180 = vmatpush2.msra.mxu0 0.0
    %181 = vmatprep.subr.mxu0 0.0
    %182 = vmatpush2.msra.mxu0 0.0
    %183 = vmatprep.subr.mxu0 0.0
    %184 = vmatpush2.msra.mxu0 0.0
    %185 = vmatprep.subr.mxu0 0.0
    %186 = vmatpush2.msra.mxu0 0.0
    %187 = vmatprep.mubr.f32.mxu0 0.0
    %188 = vmatmul.mubr.f32.gmra.mxu0 %v97
    %v189 = vpop.f32.mrf.mxu0
    %v190 = vadd.f32 %v121, %v189
    %v191 = vpop.f32.mrf.mxu0
    %192 = vdwg.mxu0
    %v193 = vmax.f32 %v190, 0.0
    %194 = vst [vmem:[#allocation2] sm:$0xff] %v193
    %v195 = vld [vmem:[#allocation2] sm:$0xff]
    %v196 = vld [vmem:[%s4] sm:$0xff]
    %v197 = vld [vmem:[%s4 + $0x8] sm:$0xff]
    %v198 = vld [vmem:[%s4 + $0x10] sm:$0xff]
    %v199 = vld [vmem:[%s4 + $0x18] sm:$0xff]
    %v200 = vld [vmem:[%s4 + $0x20] sm:$0xff]
    %v201 = vld [vmem:[%s4 + $0x28] sm:$0xff]
    %v202 = vld [vmem:[%s4 + $0x30] sm:$0xff]
    %v203 = vld [vmem:[%s4 + $0x38] sm:$0xff]
    %v204 = vld [vmem:[%s4 + $0x40] sm:$0xff]
    %v205 = vld [vmem:[%s4 + $0x48] sm:$0xff]
    %v206 = vld [vmem:[%s4 + $0x50] sm:$0xff]
    %v207 = vld [vmem:[%s4 + $0x58] sm:$0xff]
    %v208 = vld [vmem:[%s4 + $0x60] sm:$0xff]
    %v209 = vld [vmem:[%s4 + $0x68] sm:$0xff]
    %v210 = vld [vmem:[%s4 + $0x70] sm:$0xff]
    %v211 = vld [vmem:[%s4 + $0x78] sm:$0xff]
    %212 = vmatprep.subr.mxu0 0.0
    %213 = vmatpush1.msra.mxu0 %v211
    %214 = vmatprep.subr.mxu0 0.0
    %215 = vmatpush1.msra.mxu0 %v210
    %216 = vmatprep.subr.mxu0 0.0
    %217 = vmatpush1.msra.mxu0 %v209
    %218 = vmatprep.subr.mxu0 0.0
    %219 = vmatpush1.msra.mxu0 %v208
    %220 = vmatprep.subr.mxu0 0.0
    %221 = vmatpush1.msra.mxu0 %v207
    %222 = vmatprep.subr.mxu0 0.0
    %223 = vmatpush1.msra.mxu0 %v206
    %224 = vmatprep.subr.mxu0 0.0
    %225 = vmatpush1.msra.mxu0 %v205
    %226 = vmatprep.subr.mxu0 0.0
    %227 = vmatpush1.msra.mxu0 %v204
    %228 = vmatprep.subr.mxu0 0.0
    %229 = vmatpush1.msra.mxu0 %v203
    %230 = vmatprep.subr.mxu0 0.0
    %231 = vmatpush1.msra.mxu0 %v202
    %232 = vmatprep.subr.mxu0 0.0
    %233 = vmatpush1.msra.mxu0 %v201
    %234 = vmatprep.subr.mxu0 0.0
    %235 = vmatpush1.msra.mxu0 %v200
    %236 = vmatprep.subr.mxu0 0.0
    %237 = vmatpush1.msra.mxu0 %v199
    %238 = vmatprep.subr.mxu0 0.0
    %239 = vmatpush1.msra.mxu0 %v198
    %240 = vmatprep.subr.mxu0 0.0
    %241 = vmatpush1.msra.mxu0 %v197
    %242 = vmatprep.subr.mxu0 0.0
    %243 = vmatpush1.msra.mxu0 %v196
    %244 = vmatprep.subr.mxu0 0.0
    %245 = vmatpush2.msra.mxu0 0.0
    %246 = vmatprep.subr.mxu0 0.0
    %247 = vmatpush2.msra.mxu0 0.0
    %248 = vmatprep.subr.mxu0 0.0
    %249 = vmatpush2.msra.mxu0 0.0
    %250 = vmatprep.subr.mxu0 0.0
    %251 = vmatpush2.msra.mxu0 0.0
    %252 = vmatprep.subr.mxu0 0.0
    %253 = vmatpush2.msra.mxu0 0.0
    %254 = vmatprep.subr.mxu0 0.0
    %255 = vmatpush2.msra.mxu0 0.0
    %256 = vmatprep.subr.mxu0 0.0
    %257 = vmatpush2.msra.mxu0 0.0
    %258 = vmatprep.subr.mxu0 0.0
    %259 = vmatpush2.msra.mxu0 0.0
    %260 = vmatprep.subr.mxu0 0.0
    %261 = vmatpush2.msra.mxu0 0.0
    %262 = vmatprep.subr.mxu0 0.0
    %263 = vmatpush2.msra.mxu0 0.0
    %264 = vmatprep.subr.mxu0 0.0
    %265 = vmatpush2.msra.mxu0 0.0
    %266 = vmatprep.subr.mxu0 0.0
    %267 = vmatpush2.msra.mxu0 0.0
    %268 = vmatprep.subr.mxu0 0.0
    %269 = vmatpush2.msra.mxu0 0.0
    %270 = vmatprep.subr.mxu0 0.0
    %271 = vmatpush2.msra.mxu0 0.0
    %272 = vmatprep.subr.mxu0 0.0
    %273 = vmatpush2.msra.mxu0 0.0
    %274 = vmatprep.subr.mxu0 0.0
    %275 = vmatpush2.msra.mxu0 0.0
    %276 = vmatprep.mubr.f32.mxu0 0.0
    %277 = vmatmul.mubr.f32.gmra.mxu0 %v195
    %v278 = vpop.f32.mrf.mxu0
    %v279 = vadd.f32 0.0, %v278
    %v280 = vpop.f32.mrf.mxu0
    %281 = vdwg.mxu0
    %v282 = vld [vmem:[%s5] sm:$0x1]
    %v284 = vlaneseq
    %v285 = vshrl.u32 %v284, 7
    %v286 = vsub.s32 0, %v285
    %v287 = vrot.slane %v282, %v286
    %289 = vmatprep.subr.mxu0 0.0
    %290 = vmatpush1.msra.mxu0 0.0
    %291 = vmatprep.subr.mxu0 0.0
    %292 = vmatpush1.msra.mxu0 0.0
    %293 = vmatprep.subr.mxu0 0.0
    %294 = vmatpush1.msra.mxu0 0.0
    %295 = vmatprep.subr.mxu0 0.0
    %296 = vmatpush1.msra.mxu0 0.0
    %297 = vmatprep.subr.mxu0 0.0
    %298 = vmatpush1.msra.mxu0 0.0
    %299 = vmatprep.subr.mxu0 0.0
    %300 = vmatpush1.msra.mxu0 0.0
    %301 = vmatprep.subr.mxu0 0.0
    %302 = vmatpush1.msra.mxu0 0.0
    %303 = vmatprep.subr.mxu0 0.0
    %304 = vmatpush1.msra.mxu0 0.0
    %305 = vmatprep.subr.mxu0 0.0
    %306 = vmatpush1.msra.mxu0 0.0
    %307 = vmatprep.subr.mxu0 0.0
    %308 = vmatpush1.msra.mxu0 0.0
    %309 = vmatprep.subr.mxu0 0.0
    %310 = vmatpush1.msra.mxu0 0.0
    %311 = vmatprep.subr.mxu0 0.0
    %312 = vmatpush1.msra.mxu0 0.0
    %313 = vmatprep.subr.mxu0 0.0
    %314 = vmatpush1.msra.mxu0 0.0
    %315 = vmatprep.subr.mxu0 0.0
    %316 = vmatpush1.msra.mxu0 0.0
    %317 = vmatprep.subr.mxu0 0.0
    %318 = vmatpush1.msra.mxu0 0.0
    %319 = vmatprep.subr.mxu0 0.0
    %320 = vmatpush1.msra.mxu0 %v279
    %321 = vmatprep.subr.mxu0 0.0
    %322 = vmatpush2.msra.mxu0 0.0
    %323 = vmatprep.subr.mxu0 0.0
    %324 = vmatpush2.msra.mxu0 0.0
    %325 = vmatprep.subr.mxu0 0.0
    %326 = vmatpush2.msra.mxu0 0.0
    %327 = vmatprep.subr.mxu0 0.0
    %328 = vmatpush2.msra.mxu0 0.0
    %329 = vmatprep.subr.mxu0 0.0
    %330 = vmatpush2.msra.mxu0 0.0
    %331 = vmatprep.subr.mxu0 0.0
    %332 = vmatpush2.msra.mxu0 0.0
    %333 = vmatprep.subr.mxu0 0.0
    %334 = vmatpush2.msra.mxu0 0.0
    %335 = vmatprep.subr.mxu0 0.0
    %336 = vmatpush2.msra.mxu0 0.0
    %337 = vmatprep.subr.mxu0 0.0
    %338 = vmatpush2.msra.mxu0 0.0
    %339 = vmatprep.subr.mxu0 0.0
    %340 = vmatpush2.msra.mxu0 0.0
    %341 = vmatprep.subr.mxu0 0.0
    %342 = vmatpush2.msra.mxu0 0.0
    %343 = vmatprep.subr.mxu0 0.0
    %344 = vmatpush2.msra.mxu0 0.0
    %345 = vmatprep.subr.mxu0 0.0
    %346 = vmatpush2.msra.mxu0 0.0
    %347 = vmatprep.subr.mxu0 0.0
    %348 = vmatpush2.msra.mxu0 0.0
    %349 = vmatprep.subr.mxu0 0.0
    %350 = vmatpush2.msra.mxu0 0.0
    %351 = vmatprep.subr.mxu0 0.0
    %352 = vmatpush2.msra.mxu0 0.0
    %353 = vmatprep.mubr.f32.mxu0 0.0
    %354 = vmatmul.mubr.f32.gmra.mxu0 %v28
    %v355 = vpop.f32.mrf.mxu0
    %v356 = vadd.f32 %v287, %v355
    %v357 = vpop.f32.mrf.mxu0
    %358 = vdwg.mxu0
    %v359 = vmax.f32 %v356, 0.0
    %360 = vst [vmem:[#allocation3] sm:$0xff] %v359
    // Predicated region
    $region26: #{gnn_forward.1} parent=1 // pred_check
      _
    $region27: #{gnn_forward.1} parent=1 // pred_check_branch
      %362 = sbr.rel (0) target = $region29
    $region28: #{gnn_forward.1} parent=1 // pred_region
      %s364 = ssub.s32 128, 128
      %365 = vsyncadd [#allocation4], %s364
      %s367 = sshll.u32 [#allocation3], 4
      %s368 = int_to_ptr.vmem [resolvable:$true] %s367
      %370 = dma.vmem_to_hbm [thread:$0]  %s368, 128, %s6, [#allocation4]
    $region29: #{gnn_forward.1} parent=1 // pred_fallthru
      _
    // Predicated region
    $region30: #{gnn_forward.1} parent=1 // pred_check
      _
    $region31: #{gnn_forward.1} parent=1 // pred_check_branch
      %372 = sbr.rel (0) target = $region33
    $region32: #{gnn_forward.1} parent=1 // pred_region
      %373 = dma.done [#allocation4], 128
    $region33: #{gnn_forward.1} parent=1 // pred_fallthru
      _
    %374 = vsyncpa [#allocation4], 1

</llo_original>
